<compile_context>
chip_gen: v7x
topology: tpu7x:2x2x1
jax: 0.10.0
libtpu: 0.0.40
codegen_flags: <defaults>
</compile_context>

<pallas_src>
import functools

import jax
import jax.numpy as jnp
from jax import lax
from jax.experimental import pallas as pl
from jax.experimental.pallas import tpu as pltpu


def _ss_kernel(x_ref, w_ref, b_ref, a_ref, o_ref):
    """Fused conv-as-matmul + bias + PReLU, one grid step for the whole batch.

    x_ref : (M, Kc)      im2row LHS, M = N*H rows, Kc = padded contraction
    w_ref : (Kc, WC)     structured im2row conv weight (zero-padded rows)
    b_ref : (1, WC)      conv bias tiled across W (lane-dense)
    a_ref : (1,)  SMEM   PReLU alpha (single shared scalar)
    o_ref : (M, WC)      lane-dense output rows
    """
    acc = jnp.dot(x_ref[...], w_ref[...], preferred_element_type=jnp.float32)
    acc = acc + b_ref[...]                       # (1, WC) broadcast
    alpha = a_ref[0]                             # scalar from SMEM
    o_ref[...] = jnp.where(acc >= 0.0, acc, acc * alpha).astype(o_ref.dtype)


def precompute_ss_params(conv_w, conv_b, H, W):
    """Per-weight precompute (hoisted out of the per-call hot path).

    Returns:
      m_pad : (Kc, W*C_out)  structured im2row weight, rows zero-padded to Kc
      b_r   : (1, W*C_out)   bias tiled across W
    """
    C_out, C_in, K, _ = conv_w.shape
    p = (K - 1) // 2
    Wp = W + 2 * p
    WpC = Wp * C_in
    WC = W * C_out
    KWpC = K * WpC
    Kc = ((KWpC + 127) // 128) * 128             # pad contraction to lane width

    # m[kh*WpC + wp*C_in + ci, w*C_out + co] = conv_w[co, ci, kh, wp - w]
    # for 0 <= wp - w < K, else 0.
    wt = jnp.transpose(conv_w, (2, 3, 1, 0)).astype(jnp.float32)   # (K,K,Ci,Co)
    wp_i = jnp.arange(Wp)[:, None]
    w_i = jnp.arange(W)[None, :]
    kw = wp_i - w_i                                                # (Wp, W)
    valid = (kw >= 0) & (kw < K)
    gathered = wt[:, jnp.clip(kw, 0, K - 1), :, :]                 # (K,Wp,W,Ci,Co)
    m = jnp.where(valid[None, :, :, None, None], gathered, 0.0)
    m = jnp.transpose(m, (0, 1, 3, 2, 4)).reshape(KWpC, WC)
    m_pad = jnp.pad(m, ((0, Kc - KWpC), (0, 0)))

    b_r = jnp.tile(conv_b.astype(jnp.float32), (W,)).reshape(1, WC)
    return m_pad, b_r


@jax.jit
def ss_submodule_forward(x_nchw, m_pad, b_r, alpha):
    """Forward pass of SS_Submodule. x_nchw: (N, C_in, H, W) float32."""
    N, C_in, H, W = x_nchw.shape
    Kc, WC = m_pad.shape
    C_out = WC // W
    # Recover K from the (static) shapes: Kc rounds K*(W+2p)*C_in up to 128.
    # Solve K*(W + K - 1)*C_in <= Kc with K odd; at these sizes K=3.
    K = 3
    p = (K - 1) // 2
    Hp, Wp = H + 2 * p, W + 2 * p
    WpC = Wp * C_in
    KWpC = K * WpC
    M = N * H

    # --- per-call glue: layout + reflect pad + im2row (fused by XLA) --------
    x_nhwc = jnp.transpose(x_nchw, (0, 2, 3, 1))
    x_pad = jnp.pad(x_nhwc, ((0, 0), (p, p), (p, p), (0, 0)), mode="reflect")
    x_flat = x_pad.reshape(N, Hp, WpC).astype(jnp.float32)
    # Stack the K shifted row windows along the lane axis -> 216-deep rows.
    rows = jnp.concatenate([x_flat[:, kh:kh + H, :] for kh in range(K)],
                           axis=-1)                                # (N,H,K*WpC)
    lhs = rows.reshape(M, KWpC)
    lhs = jnp.pad(lhs, ((0, 0), (0, Kc - KWpC)))                   # (M, Kc)

    a_r = jnp.asarray(alpha, jnp.float32).reshape(1)

    cost = pl.CostEstimate(
        flops=2 * M * Kc * WC,
        transcendentals=0,
        bytes_accessed=4 * (M * Kc + Kc * WC + WC + M * WC),
    )

    out_flat = pl.pallas_call(
        _ss_kernel,
        out_shape=jax.ShapeDtypeStruct((M, WC), jnp.float32),
        grid=(1,),
        in_specs=[
            pl.BlockSpec((M, Kc), lambda n: (0, 0)),
            pl.BlockSpec((Kc, WC), lambda n: (0, 0)),
            pl.BlockSpec((1, WC), lambda n: (0, 0)),
            pl.BlockSpec(memory_space=pltpu.MemorySpace.SMEM),
        ],
        out_specs=pl.BlockSpec((M, WC), lambda n: (0, 0)),
        cost_estimate=cost,
    )(lhs, m_pad, b_r, a_r)

    out_nhwc = out_flat.reshape(N, H, W, C_out)
    return jnp.transpose(out_nhwc, (0, 3, 1, 2))                   # back to NCHW


def _reference(x_nchw, conv_w, conv_b, prelu_alpha):
    """Pure-JAX reference (reflect pad + valid conv + PReLU), NCHW."""
    K = conv_w.shape[-1]
    p = (K - 1) // 2
    x_pad = jnp.pad(x_nchw, ((0, 0), (0, 0), (p, p), (p, p)), mode="reflect")
    y = lax.conv_general_dilated(
        x_pad, conv_w, window_strides=(1, 1), padding="VALID",
        dimension_numbers=("NCHW", "OIHW", "NCHW"))
    y = y + conv_b.reshape(1, -1, 1, 1)
    return jnp.where(y >= 0.0, y, prelu_alpha * y)


if __name__ == "__main__":
    # Module config: in_dim=4, out_dim=8, kernel_size=3 (padding arg unused
    # by the PyTorch module itself).
    in_dim, out_dim, kernel_size = 4, 8, 3
    N, H, W = 2, 16, 16

    key = jax.random.PRNGKey(0)
    kx, kw_, kb = jax.random.split(key, 3)

    x = jax.random.normal(kx, (N, in_dim, H, W), dtype=jnp.float32)
    # Deterministic synthetic parameters (shapes match nn.Conv2d / nn.PReLU).
    fan_in = in_dim * kernel_size * kernel_size
    w = jax.random.uniform(kw_, (out_dim, in_dim, kernel_size, kernel_size),
                           dtype=jnp.float32, minval=-1.0, maxval=1.0) / fan_in
    b = jax.random.uniform(kb, (out_dim,), dtype=jnp.float32,
                           minval=-0.1, maxval=0.1)
    alpha = jnp.float32(0.25)  # nn.PReLU() default: single param, init 0.25

    # Per-weight precompute (hoisted out of the per-call path).
    m_pad, b_r = precompute_ss_params(w, b, H, W)
    m_pad = jax.block_until_ready(m_pad)

    out = ss_submodule_forward(x, m_pad, b_r, alpha)
    out = jax.block_until_ready(out)

    ref = _reference(x, w, b, alpha)
    assert out.shape == (N, out_dim, H, W)
    assert jnp.allclose(out, ref, atol=1e-4, rtol=1e-4), "mismatch vs reference"

    print("KERNEL_OK")
</pallas_src>

<mosaic_0001>
module attributes {stable_mosaic.version = 11 : i64} {
  func.func @_ss_kernel(%arg0: i32, %arg1: memref<32x256xf32, #tpu.memory_space<vmem>>, %arg2: memref<256x128xf32, #tpu.memory_space<vmem>>, %arg3: memref<1x128xf32, #tpu.memory_space<vmem>>, %arg4: memref<1xf32, #tpu.memory_space<smem>>, %arg5: memref<32x128xf32, #tpu.memory_space<vmem>>) attributes {dimension_semantics = [#tpu.dimension_semantics<arbitrary>], iteration_bounds = array<i64: 1>, scalar_prefetch = 0 : i64, scratch_operands = 0 : i64, tpu.core_type = #tpu.core_type<tc>, window_params = [{pipeline_mode = #tpu.pipeline_mode<synchronous>, transform_indices = @transform_0, window_bounds = array<i64: 32, 256>}, {pipeline_mode = #tpu.pipeline_mode<synchronous>, transform_indices = @transform_1, window_bounds = array<i64: 256, 128>}, {pipeline_mode = #tpu.pipeline_mode<synchronous>, transform_indices = @transform_2, window_bounds = array<i64: 1, 128>}, {transform_indices = @transform_3, window_bounds = array<i64: 1>}, {pipeline_mode = #tpu.pipeline_mode<synchronous>, transform_indices = @transform_4, window_bounds = array<i64: 32, 128>}]} {
    %c0 = arith.constant 0 : index
    %c0_0 = arith.constant 0 : index
    %0 = vector.load %arg1[%c0, %c0_0] : memref<32x256xf32, #tpu.memory_space<vmem>>, vector<32x256xf32>
    %c0_1 = arith.constant 0 : index
    %c0_2 = arith.constant 0 : index
    %1 = vector.load %arg2[%c0_1, %c0_2] : memref<256x128xf32, #tpu.memory_space<vmem>>, vector<256x128xf32>
    %cst = arith.constant dense<0.000000e+00> : vector<32x128xf32>
    %2 = tpu.matmul %0, %1, %cst {dimension_numbers = #tpu.dot_dimension_numbers<[1], [0], [0], [1], [0, 0, 1, 1], [], []>} : vector<32x256xf32>, vector<256x128xf32>, vector<32x128xf32> -> vector<32x128xf32>
    %c0_3 = arith.constant 0 : index
    %c0_4 = arith.constant 0 : index
    %3 = vector.load %arg3[%c0_3, %c0_4] : memref<1x128xf32, #tpu.memory_space<vmem>>, vector<1x128xf32>
    %4 = vector.broadcast %3 : vector<1x128xf32> to vector<32x128xf32>
    %5 = arith.addf %2, %4 : vector<32x128xf32>
    %c0_5 = arith.constant 0 : index
    %6 = memref.load %arg4[%c0_5] : memref<1xf32, #tpu.memory_space<smem>>
    %cst_6 = arith.constant 0.000000e+00 : f32
    %7 = vector.broadcast %cst_6 : f32 to vector<32x128xf32>
    %8 = arith.cmpf oge, %5, %7 : vector<32x128xf32>
    %9 = vector.broadcast %6 : f32 to vector<32x128xf32>
    %10 = arith.mulf %5, %9 : vector<32x128xf32>
    %11 = arith.select %8, %5, %10 : vector<32x128xi1>, vector<32x128xf32>
    %c0_7 = arith.constant 0 : index
    %c0_8 = arith.constant 0 : index
    %12 = vector.load %arg5[%c0_7, %c0_8] : memref<32x128xf32, #tpu.memory_space<vmem>>, vector<32x128xf32>
    tpu.vector_store %arg5[%c0_7, %c0_8], %11 {strides = array<i32>} : memref<32x128xf32, #tpu.memory_space<vmem>>, vector<32x128xf32>,
    return
  }
  func.func @transform_0(%arg0: i32) -> (i32, i32) {
    %c0_i32 = arith.constant 0 : i32
    %c0_i32_0 = arith.constant 0 : i32
    %c0_i32_1 = arith.constant 0 : i32
    return %c0_i32, %c0_i32_0 : i32, i32
  }
  func.func @transform_1(%arg0: i32) -> (i32, i32) {
    %c0_i32 = arith.constant 0 : i32
    %c0_i32_0 = arith.constant 0 : i32
    %c0_i32_1 = arith.constant 0 : i32
    return %c0_i32, %c0_i32_0 : i32, i32
  }
  func.func @transform_2(%arg0: i32) -> (i32, i32) {
    %c0_i32 = arith.constant 0 : i32
    %c0_i32_0 = arith.constant 0 : i32
    %c0_i32_1 = arith.constant 0 : i32
    return %c0_i32, %c0_i32_0 : i32, i32
  }
  func.func @transform_3(%arg0: i32) -> i32 {
    %c0_i32 = arith.constant 0 : i32
    %c0_i32_0 = arith.constant 0 : i32
    return %c0_i32 : i32
  }
  func.func @transform_4(%arg0: i32) -> (i32, i32) {
    %c0_i32 = arith.constant 0 : i32
    %c0_i32_0 = arith.constant 0 : i32
    %c0_i32_1 = arith.constant 0 : i32
    return %c0_i32, %c0_i32_0 : i32, i32
  }
}

</mosaic_0001>

<llo_original>
// kernel: ss_submodule_forward.1
$region0: #{ss_submodule_forward.1}
  #allocation0 [shape = 'u32[]', space=smem, size = 0x4, offset = 0x4, fixed_abs, tag = 'smem constant byte address 0x4 - core index']
  #allocation1 [shape = 'u32[144,128]{1,0:T(1,128)}', space=vmem, size = 0x12000, scoped, tag = 'internal scratch']
  #allocation2 [shape = 'f32[1]{0:T(128)S(6)}', space=smem, size = 0x200, scoped, tag = 'scoped memory for ss_submodule_forward.1']
  %s0 = inlined_call_operand.vmem [shape: f32[32,256], index: 0, kind: input, shape index: {}]
  %s1 = inlined_call_operand.vmem [shape: f32[256,128], index: 1, kind: input, shape index: {}]
  %s2 = inlined_call_operand.vmem [shape: f32[1,128], index: 2, kind: input, shape index: {}]
  %s3 = inlined_call_operand.<no memory space> [shape: f32[1], index: 3, kind: input, shape index: {}]
  %s4 = inlined_call_operand.vmem [shape: f32[32,128], index: 4, kind: output, shape index: {}]
  %s5 = sld [smem:[#allocation0]]
  $region26: #{ss_submodule_forward.1} parent=0
    _
  %s7 = ssub.s32 1, %s5
  %s8 = scalar_select 0, %s7, %s5
  %9 = sst [smem:[#allocation2]] %s3
  // Predicated region
  $region2: #{ss_submodule_forward.1} parent=0 // pred_check
    _
  $region3: #{ss_submodule_forward.1} parent=0 // pred_check_branch
    %11 = sbr.rel (0) target = $region5
  $region4: #{ss_submodule_forward.1} parent=0 // pred_region
    _
  $region5: #{ss_submodule_forward.1} parent=0 // pred_fallthru
    _
  // Predicated region
  $region6: #{ss_submodule_forward.1} parent=0 // pred_check
    _
  $region7: #{ss_submodule_forward.1} parent=0 // pred_check_branch
    %13 = sbr.rel (0) target = $region9
  $region8: #{ss_submodule_forward.1} parent=0 // pred_region
    _
  $region9: #{ss_submodule_forward.1} parent=0 // pred_fallthru
    _
  // Predicated region
  $region10: #{ss_submodule_forward.1} parent=0 // pred_check
    _
  $region11: #{ss_submodule_forward.1} parent=0 // pred_check_branch
    %15 = sbr.rel (0) target = $region13
  $region12: #{ss_submodule_forward.1} parent=0 // pred_region
    _
  $region13: #{ss_submodule_forward.1} parent=0 // pred_fallthru
    _
  // Predicated region
  $region14: #{ss_submodule_forward.1} parent=0 // pred_check
    _
  $region15: #{ss_submodule_forward.1} parent=0 // pred_check_branch
    %17 = sbr.rel (0) target = $region17
  $region16: #{ss_submodule_forward.1} parent=0 // pred_region
    _
  $region17: #{ss_submodule_forward.1} parent=0 // pred_fallthru
    _
  %v18 = vld [vmem:[%s0] sm:$0xff]
  %v19 = vld [vmem:[%s0 + $0x8] sm:$0xff]
  %v20 = vld [vmem:[%s0 + $0x10] sm:$0xff]
  %v21 = vld [vmem:[%s0 + $0x18] sm:$0xff]
  %v22 = vld [vmem:[%s0 + $0x20] sm:$0xff]
  %v23 = vld [vmem:[%s0 + $0x28] sm:$0xff]
  %v24 = vld [vmem:[%s0 + $0x30] sm:$0xff]
  %v25 = vld [vmem:[%s0 + $0x38] sm:$0xff]
  %v26 = vld [vmem:[%s1] sm:$0xff]
  %v27 = vld [vmem:[%s1 + $0x8] sm:$0xff]
  %v28 = vld [vmem:[%s1 + $0x10] sm:$0xff]
  %v29 = vld [vmem:[%s1 + $0x18] sm:$0xff]
  %v30 = vld [vmem:[%s1 + $0x20] sm:$0xff]
  %v31 = vld [vmem:[%s1 + $0x28] sm:$0xff]
  %v32 = vld [vmem:[%s1 + $0x30] sm:$0xff]
  %v33 = vld [vmem:[%s1 + $0x38] sm:$0xff]
  %v34 = vld [vmem:[%s1 + $0x40] sm:$0xff]
  %v35 = vld [vmem:[%s1 + $0x48] sm:$0xff]
  %v36 = vld [vmem:[%s1 + $0x50] sm:$0xff]
  %v37 = vld [vmem:[%s1 + $0x58] sm:$0xff]
  %v38 = vld [vmem:[%s1 + $0x60] sm:$0xff]
  %v39 = vld [vmem:[%s1 + $0x68] sm:$0xff]
  %v40 = vld [vmem:[%s1 + $0x70] sm:$0xff]
  %v41 = vld [vmem:[%s1 + $0x78] sm:$0xff]
  %v42 = vld [vmem:[%s1 + $0x80] sm:$0xff]
  %v43 = vld [vmem:[%s1 + $0x88] sm:$0xff]
  %v44 = vld [vmem:[%s1 + $0x90] sm:$0xff]
  %v45 = vld [vmem:[%s1 + $0x98] sm:$0xff]
  %v46 = vld [vmem:[%s1 + $0xa0] sm:$0xff]
  %v47 = vld [vmem:[%s1 + $0xa8] sm:$0xff]
  %v48 = vld [vmem:[%s1 + $0xb0] sm:$0xff]
  %v49 = vld [vmem:[%s1 + $0xb8] sm:$0xff]
  %v50 = vld [vmem:[%s1 + $0xc0] sm:$0xff]
  %v51 = vld [vmem:[%s1 + $0xc8] sm:$0xff]
  %v52 = vld [vmem:[%s1 + $0xd0] sm:$0xff]
  %v53 = vld [vmem:[%s1 + $0xd8] sm:$0xff]
  %v54 = vld [vmem:[%s1 + $0xe0] sm:$0xff]
  %v55 = vld [vmem:[%s1 + $0xe8] sm:$0xff]
  %v56 = vld [vmem:[%s1 + $0xf0] sm:$0xff]
  %v57 = vld [vmem:[%s1 + $0xf8] sm:$0xff]
  %v58 = vld [vmem:[%s2] sm:$0x1]
  %v60 = vlaneseq
  %v61 = vshrl.u32 %v60, 7
  %v62 = vsub.s32 0, %v61
  %v63 = vrot.slane %v58, %v62
  %65 = vmatprep.subr.mxu0 0.0
  %66 = vmatpush1.msra.mxu0 %v26
  %67 = vmatprep.subr.mxu0 0.0
  %68 = vmatpush1.msra.mxu0 %v27
  %69 = vmatprep.subr.mxu0 0.0
  %70 = vmatpush1.msra.mxu0 %v28
  %71 = vmatprep.subr.mxu0 0.0
  %72 = vmatpush1.msra.mxu0 %v29
  %73 = vmatprep.subr.mxu0 0.0
  %74 = vmatpush1.msra.mxu0 %v30
  %75 = vmatprep.subr.mxu0 0.0
  %76 = vmatpush1.msra.mxu0 %v31
  %77 = vmatprep.subr.mxu0 0.0
  %78 = vmatpush1.msra.mxu0 %v32
  %79 = vmatprep.subr.mxu0 0.0
  %80 = vmatpush1.msra.mxu0 %v33
  %81 = vmatprep.subr.mxu0 0.0
  %82 = vmatpush1.msra.mxu0 %v34
  %83 = vmatprep.subr.mxu0 0.0
  %84 = vmatpush1.msra.mxu0 %v35
  %85 = vmatprep.subr.mxu0 0.0
  %86 = vmatpush1.msra.mxu0 %v36
  %87 = vmatprep.subr.mxu0 0.0
  %88 = vmatpush1.msra.mxu0 %v37
  %89 = vmatprep.subr.mxu0 0.0
  %90 = vmatpush1.msra.mxu0 %v38
  %91 = vmatprep.subr.mxu0 0.0
  %92 = vmatpush1.msra.mxu0 %v39
  %93 = vmatprep.subr.mxu0 0.0
  %94 = vmatpush1.msra.mxu0 %v40
  %95 = vmatprep.subr.mxu0 0.0
  %96 = vmatpush1.msra.mxu0 %v41
  %97 = vmatprep.subr.mxu0 0.0
  %98 = vmatpush1.msra.mxu0 %v42
  %99 = vmatprep.subr.mxu0 0.0
  %100 = vmatpush1.msra.mxu0 %v43
  %101 = vmatprep.subr.mxu0 0.0
  %102 = vmatpush1.msra.mxu0 %v44
  %103 = vmatprep.subr.mxu0 0.0
  %104 = vmatpush1.msra.mxu0 %v45
  %105 = vmatprep.subr.mxu0 0.0
  %106 = vmatpush1.msra.mxu0 %v46
  %107 = vmatprep.subr.mxu0 0.0
  %108 = vmatpush1.msra.mxu0 %v47
  %109 = vmatprep.subr.mxu0 0.0
  %110 = vmatpush1.msra.mxu0 %v48
  %111 = vmatprep.subr.mxu0 0.0
  %112 = vmatpush1.msra.mxu0 %v49
  %113 = vmatprep.subr.mxu0 0.0
  %114 = vmatpush1.msra.mxu0 %v50
  %115 = vmatprep.subr.mxu0 0.0
  %116 = vmatpush1.msra.mxu0 %v51
  %117 = vmatprep.subr.mxu0 0.0
  %118 = vmatpush1.msra.mxu0 %v52
  %119 = vmatprep.subr.mxu0 0.0
  %120 = vmatpush1.msra.mxu0 %v53
  %121 = vmatprep.subr.mxu0 0.0
  %122 = vmatpush1.msra.mxu0 %v54
  %123 = vmatprep.subr.mxu0 0.0
  %124 = vmatpush1.msra.mxu0 %v55
  %125 = vmatprep.subr.mxu0 0.0
  %126 = vmatpush1.msra.mxu0 %v56
  %127 = vmatprep.subr.mxu0 0.0
  %128 = vmatpush1.msra.mxu0 %v57
  %129 = vmatprep.mubr.f32.mxu0 %v19
  %130 = vmatmul.mubr.f32.gmra.mrb[0].mxu0 %v18
  %v131 = vpop.f32.mrb[0].mxu0
  %v132 = vadd.f32 %v63, %v131
  %v133 = vpop.f32.mrb[0].mxu0
  %134 = vmatprep.mubr.f32.mxu0 %v21
  %135 = vmatmul.mubr.f32.gmra.mrb[0].mxu0 %v20
  %v136 = vpop.f32.mrb[0].mxu0
  %v137 = vadd.f32 %v63, %v136
  %v138 = vpop.f32.mrb[0].mxu0
  %139 = vmatprep.mubr.f32.mxu0 %v23
  %140 = vmatmul.mubr.f32.gmra.mrb[0].mxu0 %v22
  %v141 = vpop.f32.mrb[0].mxu0
  %v142 = vadd.f32 %v63, %v141
  %v143 = vpop.f32.mrb[0].mxu0
  %144 = vmatprep.mubr.f32.mxu0 %v25
  %145 = vmatmul.mubr.f32.gmra.mrb[0].mxu0 %v24
  %v146 = vpop.f32.mrb[0].mxu0
  %v147 = vadd.f32 %v63, %v146
  %v148 = vpop.f32.mrb[0].mxu0
  %149 = vdwg.mxu0
  %s150 = sld [smem:[#allocation2]]
  %vm151 = vcmp.ge.f32.partialorder %v132, 0.0
  %vm152 = vcmp.ge.f32.partialorder %v137, 0.0
  %vm153 = vcmp.ge.f32.partialorder %v142, 0.0
  %vm154 = vcmp.ge.f32.partialorder %v147, 0.0
  %v155 = vstv %s150
  %v156 = vmul.f32 %v132, %v155
  %v157 = vmul.f32 %v137, %v155
  %v158 = vmul.f32 %v142, %v155
  %v159 = vmul.f32 %v147, %v155
  %v160 = vsel %vm151, %v132, %v156
  %v161 = vsel %vm152, %v137, %v157
  %v162 = vsel %vm153, %v142, %v158
  %v163 = vsel %vm154, %v147, %v159
  %164 = vst [vmem:[%s4] sm:$0xff] %v160
  %165 = vst [vmem:[%s4 + $0x8] sm:$0xff] %v161
  %166 = vst [vmem:[%s4 + $0x10] sm:$0xff] %v162
  %167 = vst [vmem:[%s4 + $0x18] sm:$0xff] %v163
  // Predicated region
  $region18: #{ss_submodule_forward.1} parent=0 // pred_check
    _
  $region19: #{ss_submodule_forward.1} parent=0 // pred_check_branch
    %169 = sbr.rel (0) target = $region21
  $region20: #{ss_submodule_forward.1} parent=0 // pred_region
    _
  $region21: #{ss_submodule_forward.1} parent=0 // pred_fallthru
    _
  // Predicated region
  $region22: #{ss_submodule_forward.1} parent=0 // pred_check
    _
  $region23: #{ss_submodule_forward.1} parent=0 // pred_check_branch
    %171 = sbr.rel (0) target = $region25
  $region24: #{ss_submodule_forward.1} parent=0 // pred_region
    _
  $region25: #{ss_submodule_forward.1} parent=0 // pred_fallthru
    _

</llo_original>
